<compile_context>
chip_gen: v5e
topology: v5e:2x2
jax: 0.10.0
libtpu: 0.0.40
codegen_flags: <defaults>
</compile_context>

<pallas_src>
import functools

import jax
import jax.numpy as jnp
from jax.experimental import pallas as pl
from jax.experimental.pallas import tpu as pltpu


def _round_up(x, m):
    return ((x + m - 1) // m) * m


def _distmult_kernel(src_ref, rel_ref, dst_ref, out_ref):
    # src_ref/rel_ref/dst_ref: (C_pad, TILE_E) tiles in VMEM
    #   channels on sublanes, edges on lanes.
    # out_ref: (1, TILE_E) lane-dense tile of the (1, E_pad) output.
    prod = src_ref[...] * rel_ref[...] * dst_ref[...]
    out_ref[...] = jnp.sum(prod, axis=0, keepdims=True)


def distmult_scores(src_t, rel_t, dst_t, *, tile_e):
    """Per-edge DistMult scores from channel-major gathered embeddings.

    Args:
      src_t, rel_t, dst_t: (C_pad, E_pad) float32, C_pad % 8 == 0,
        E_pad % tile_e == 0.
    Returns:
      (1, E_pad) float32 scores.
    """
    c_pad, e_pad = src_t.shape
    assert e_pad % tile_e == 0

    grid = (e_pad // tile_e,)
    in_spec = pl.BlockSpec((c_pad, tile_e), lambda i: (0, i))
    out_spec = pl.BlockSpec((1, tile_e), lambda i: (0, i))

    return pl.pallas_call(
        _distmult_kernel,
        out_shape=jax.ShapeDtypeStruct((1, e_pad), jnp.float32),
        grid_spec=pltpu.PrefetchScalarGridSpec(
            num_scalar_prefetch=0,
            grid=grid,
            in_specs=[in_spec, in_spec, in_spec],
            out_specs=out_spec,
        ),
        compiler_params=pltpu.CompilerParams(
            dimension_semantics=("parallel",),
            # Explicit scoped VMEM: raises v5e's 16 MiB default, matches the
            # v6e/v7x default; actual footprint (3 inputs x 2 buffers of
            # (C_pad, tile_e) f32) stays well under this on all generations.
            vmem_limit_bytes=32 * 1024 * 1024,
        ),
    )(src_t, rel_t, dst_t)


def distmult_edge_scores(init_t, rel_t, edge_index, edge_type, *, tile_e=4096):
    """Full forward: pad ids, gather channel-major, run the Pallas kernel.

    Args:
      init_t: (C_pad, n_entities) float32, channel-major entity embeddings.
      rel_t:  (C_pad, n_relations) float32, channel-major relation embeddings.
      edge_index: (2, E) int32.
      edge_type:  (E,) int32.
    Returns:
      (E,) float32 scores.
    """
    e = edge_index.shape[1]
    # Shrink the tile for small edge counts, keep it lane-aligned (x128).
    tile = min(tile_e, _round_up(max(e, 1), 128))
    e_pad = _round_up(e, tile)

    src = edge_index[0]
    dst = edge_index[1]
    typ = edge_type
    if e_pad != e:
        pad = (0, e_pad - e)
        src = jnp.pad(src, pad)  # pad value 0 -> valid row, sliced off below
        dst = jnp.pad(dst, pad)
        typ = jnp.pad(typ, pad)

    # Channel-major gathers: results are (C_pad, E_pad) with edges on lanes.
    src_g = jnp.take(init_t, src, axis=1, mode="clip")
    dst_g = jnp.take(init_t, dst, axis=1, mode="clip")
    rel_g = jnp.take(rel_t, typ, axis=1, mode="clip")

    scores = distmult_scores(src_g, rel_g, dst_g, tile_e=tile)  # (1, E_pad)
    return scores.reshape(e_pad)[:e]


class DistMultJax:
    """JAX/Pallas port of the PyTorch DistMult module."""

    def __init__(self, n_relations, n_entities, n_channels=50, *, key):
        k_init, k_rel = jax.random.split(key)
        # nn.Parameter(torch.randn(n_entities, n_channels))
        self.initializations = jax.random.normal(
            k_init, (n_entities, n_channels), dtype=jnp.float32)
        # DistMultDecoder relation embeddings: (n_relations, n_channels)
        self.rel_emb = jax.random.normal(
            k_rel, (n_relations, n_channels), dtype=jnp.float32)
        self.n_channels = n_channels

        # Channel-major, channel-padded copies used on the hot path.
        # Zero-padded channels contribute nothing to the score.
        c_pad = _round_up(n_channels, 8)
        pad_c = ((0, 0), (0, c_pad - n_channels))
        self._init_t = jnp.pad(self.initializations, pad_c).T  # (C_pad, n_ent)
        self._rel_t = jnp.pad(self.rel_emb, pad_c).T            # (C_pad, n_rel)

    @functools.partial(jax.jit, static_argnums=0)
    def forward(self, edge_index, edge_type):
        # TODO(synk): fuse the embedding row gathers into the Pallas kernel
        # (scalar-prefetched ids + DMA row-gather) to avoid materializing the
        # three (C_pad, E) intermediates in HBM.
        return distmult_edge_scores(
            self._init_t, self._rel_t, edge_index, edge_type)


if __name__ == "__main__":
    key = jax.random.PRNGKey(0)
    k_model, k_src, k_dst, k_type = jax.random.split(key, 4)

    n_relations = 6
    n_entities = 40
    n_channels = 50     # module default; padded to 56 channels internally
    num_edges = 300     # not a multiple of 128 -> exercises edge-id padding

    model = DistMultJax(n_relations, n_entities, n_channels, key=k_model)

    src = jax.random.randint(k_src, (num_edges,), 0, n_entities, dtype=jnp.int32)
    dst = jax.random.randint(k_dst, (num_edges,), 0, n_entities, dtype=jnp.int32)
    edge_index = jnp.stack([src, dst], axis=0)              # (2, E)
    edge_type = jax.random.randint(k_type, (num_edges,), 0, n_relations,
                                   dtype=jnp.int32)         # (E,)

    scores = model.forward(edge_index, edge_type)
    jax.block_until_ready(scores)

    # Reference check against pure JAX (original (E, C) layout).
    z_src = model.initializations[edge_index[0]]
    z_dst = model.initializations[edge_index[1]]
    rel = model.rel_emb[edge_type]
    ref = jnp.sum(z_src * rel * z_dst, axis=-1)
    assert scores.shape == (num_edges,)
    assert jnp.allclose(scores, ref, atol=1e-4, rtol=1e-4)

    print("KERNEL_OK")
</pallas_src>

<mosaic_0001>
module attributes {stable_mosaic.version = 11 : i64} {
  func.func @_distmult_kernel(%arg0: i32, %arg1: memref<56x384xf32, #tpu.memory_space<vmem>>, %arg2: memref<56x384xf32, #tpu.memory_space<vmem>>, %arg3: memref<56x384xf32, #tpu.memory_space<vmem>>, %arg4: memref<1x384xf32, #tpu.memory_space<vmem>>) attributes {dimension_semantics = [#tpu.dimension_semantics<parallel>], iteration_bounds = array<i64: 1>, scalar_prefetch = 0 : i64, scratch_operands = 0 : i64, tpu.core_type = #tpu.core_type<tc>, window_params = [{transform_indices = @transform_0, window_bounds = array<i64: 56, 384>}, {transform_indices = @transform_1, window_bounds = array<i64: 56, 384>}, {transform_indices = @transform_2, window_bounds = array<i64: 56, 384>}, {transform_indices = @transform_3, window_bounds = array<i64: 1, 384>}]} {
    %c0 = arith.constant 0 : index
    %c0_0 = arith.constant 0 : index
    %0 = vector.load %arg1[%c0, %c0_0] : memref<56x384xf32, #tpu.memory_space<vmem>>, vector<56x384xf32>
    %c0_1 = arith.constant 0 : index
    %c0_2 = arith.constant 0 : index
    %1 = vector.load %arg2[%c0_1, %c0_2] : memref<56x384xf32, #tpu.memory_space<vmem>>, vector<56x384xf32>
    %2 = arith.mulf %0, %1 : vector<56x384xf32>
    %c0_3 = arith.constant 0 : index
    %c0_4 = arith.constant 0 : index
    %3 = vector.load %arg3[%c0_3, %c0_4] : memref<56x384xf32, #tpu.memory_space<vmem>>, vector<56x384xf32>
    %4 = arith.mulf %2, %3 : vector<56x384xf32>
    %cst = arith.constant dense<0.000000e+00> : vector<384xf32>
    %5 = vector.multi_reduction <add>, %4, %cst [0] : vector<56x384xf32> to vector<384xf32>
    %6 = vector.shape_cast %5 : vector<384xf32> to vector<1x384xf32>
    %c0_5 = arith.constant 0 : index
    %c0_6 = arith.constant 0 : index
    %7 = vector.load %arg4[%c0_5, %c0_6] : memref<1x384xf32, #tpu.memory_space<vmem>>, vector<1x384xf32>
    tpu.vector_store %arg4[%c0_5, %c0_6], %6 {strides = array<i32>} : memref<1x384xf32, #tpu.memory_space<vmem>>, vector<1x384xf32>,
    return
  }
  func.func @transform_0(%arg0: i32) -> (i32, i32) {
    %c0_i32 = arith.constant 0 : i32
    %c0_i32_0 = arith.constant 0 : i32
    return %c0_i32, %arg0 : i32, i32
  }
  func.func @transform_1(%arg0: i32) -> (i32, i32) {
    %c0_i32 = arith.constant 0 : i32
    %c0_i32_0 = arith.constant 0 : i32
    return %c0_i32, %arg0 : i32, i32
  }
  func.func @transform_2(%arg0: i32) -> (i32, i32) {
    %c0_i32 = arith.constant 0 : i32
    %c0_i32_0 = arith.constant 0 : i32
    return %c0_i32, %arg0 : i32, i32
  }
  func.func @transform_3(%arg0: i32) -> (i32, i32) {
    %c0_i32 = arith.constant 0 : i32
    %c0_i32_0 = arith.constant 0 : i32
    return %c0_i32, %arg0 : i32, i32
  }
}

</mosaic_0001>

<llo_original>
// kernel: forward.1
$region0: #{forward.1}
  #allocation0 [shape = 'u32[]', space=smem, size = 0x4, offset = 0x4, fixed_abs, tag = 'smem constant byte address 0x4 - core index']
  #allocation1 [shape = 'u32[72,128]{1,0:T(1,128)}', space=vmem, size = 0x9000, scoped, tag = 'internal scratch']
  %s0 = inlined_call_operand.vmem [shape: f32[56,384], index: 0, kind: input, shape index: {}]
  %s1 = inlined_call_operand.vmem [shape: f32[56,384], index: 1, kind: input, shape index: {}]
  %s2 = inlined_call_operand.vmem [shape: f32[56,384], index: 2, kind: input, shape index: {}]
  %s3 = inlined_call_operand.vmem [shape: f32[1,384], index: 3, kind: output, shape index: {}]
  %s4 = sld [smem:[#allocation0]]
  $region22: #{forward.1} parent=0
    _
  %s6 = ssub.s32 1, %s4
  %s7 = scalar_select 0, %s6, %s4
  // Predicated region
  $region2: #{forward.1} parent=0 // pred_check
    _
  $region3: #{forward.1} parent=0 // pred_check_branch
    %9 = sbr.rel (0) target = $region5
  $region4: #{forward.1} parent=0 // pred_region
    _
  $region5: #{forward.1} parent=0 // pred_fallthru
    _
  // Predicated region
  $region6: #{forward.1} parent=0 // pred_check
    _
  $region7: #{forward.1} parent=0 // pred_check_branch
    %11 = sbr.rel (0) target = $region9
  $region8: #{forward.1} parent=0 // pred_region
    _
  $region9: #{forward.1} parent=0 // pred_fallthru
    _
  // Predicated region
  $region10: #{forward.1} parent=0 // pred_check
    _
  $region11: #{forward.1} parent=0 // pred_check_branch
    %13 = sbr.rel (0) target = $region13
  $region12: #{forward.1} parent=0 // pred_region
    _
  $region13: #{forward.1} parent=0 // pred_fallthru
    _
  %v14 = vld [vmem:[%s0] sm:$0xff]
  %v15 = vld [vmem:[%s0 + $0x8] sm:$0xff]
  %v16 = vld [vmem:[%s0 + $0x10] sm:$0xff]
  %v17 = vld [vmem:[%s0 + $0x18] sm:$0xff]
  %v18 = vld [vmem:[%s0 + $0x20] sm:$0xff]
  %v19 = vld [vmem:[%s0 + $0x28] sm:$0xff]
  %v20 = vld [vmem:[%s0 + $0x30] sm:$0xff]
  %v21 = vld [vmem:[%s0 + $0x38] sm:$0xff]
  %v22 = vld [vmem:[%s0 + $0x40] sm:$0xff]
  %v23 = vld [vmem:[%s0 + $0x48] sm:$0xff]
  %v24 = vld [vmem:[%s0 + $0x50] sm:$0xff]
  %v25 = vld [vmem:[%s0 + $0x58] sm:$0xff]
  %v26 = vld [vmem:[%s0 + $0x60] sm:$0xff]
  %v27 = vld [vmem:[%s0 + $0x68] sm:$0xff]
  %v28 = vld [vmem:[%s0 + $0x70] sm:$0xff]
  %v29 = vld [vmem:[%s0 + $0x78] sm:$0xff]
  %v30 = vld [vmem:[%s0 + $0x80] sm:$0xff]
  %v31 = vld [vmem:[%s0 + $0x88] sm:$0xff]
  %v32 = vld [vmem:[%s0 + $0x90] sm:$0xff]
  %v33 = vld [vmem:[%s0 + $0x98] sm:$0xff]
  %v34 = vld [vmem:[%s0 + $0xa0] sm:$0xff]
  %v35 = vld [vmem:[%s1] sm:$0xff]
  %v36 = vld [vmem:[%s1 + $0x8] sm:$0xff]
  %v37 = vld [vmem:[%s1 + $0x10] sm:$0xff]
  %v38 = vld [vmem:[%s1 + $0x18] sm:$0xff]
  %v39 = vld [vmem:[%s1 + $0x20] sm:$0xff]
  %v40 = vld [vmem:[%s1 + $0x28] sm:$0xff]
  %v41 = vld [vmem:[%s1 + $0x30] sm:$0xff]
  %v42 = vld [vmem:[%s1 + $0x38] sm:$0xff]
  %v43 = vld [vmem:[%s1 + $0x40] sm:$0xff]
  %v44 = vld [vmem:[%s1 + $0x48] sm:$0xff]
  %v45 = vld [vmem:[%s1 + $0x50] sm:$0xff]
  %v46 = vld [vmem:[%s1 + $0x58] sm:$0xff]
  %v47 = vld [vmem:[%s1 + $0x60] sm:$0xff]
  %v48 = vld [vmem:[%s1 + $0x68] sm:$0xff]
  %v49 = vld [vmem:[%s1 + $0x70] sm:$0xff]
  %v50 = vld [vmem:[%s1 + $0x78] sm:$0xff]
  %v51 = vld [vmem:[%s1 + $0x80] sm:$0xff]
  %v52 = vld [vmem:[%s1 + $0x88] sm:$0xff]
  %v53 = vld [vmem:[%s1 + $0x90] sm:$0xff]
  %v54 = vld [vmem:[%s1 + $0x98] sm:$0xff]
  %v55 = vld [vmem:[%s1 + $0xa0] sm:$0xff]
  %v56 = vmul.f32 %v14, %v35
  %v57 = vmul.f32 %v15, %v36
  %v58 = vmul.f32 %v16, %v37
  %v59 = vmul.f32 %v17, %v38
  %v60 = vmul.f32 %v18, %v39
  %v61 = vmul.f32 %v19, %v40
  %v62 = vmul.f32 %v20, %v41
  %v63 = vmul.f32 %v21, %v42
  %v64 = vmul.f32 %v22, %v43
  %v65 = vmul.f32 %v23, %v44
  %v66 = vmul.f32 %v24, %v45
  %v67 = vmul.f32 %v25, %v46
  %v68 = vmul.f32 %v26, %v47
  %v69 = vmul.f32 %v27, %v48
  %v70 = vmul.f32 %v28, %v49
  %v71 = vmul.f32 %v29, %v50
  %v72 = vmul.f32 %v30, %v51
  %v73 = vmul.f32 %v31, %v52
  %v74 = vmul.f32 %v32, %v53
  %v75 = vmul.f32 %v33, %v54
  %v76 = vmul.f32 %v34, %v55
  %v77 = vld [vmem:[%s2] sm:$0xff]
  %v78 = vld [vmem:[%s2 + $0x8] sm:$0xff]
  %v79 = vld [vmem:[%s2 + $0x10] sm:$0xff]
  %v80 = vld [vmem:[%s2 + $0x18] sm:$0xff]
  %v81 = vld [vmem:[%s2 + $0x20] sm:$0xff]
  %v82 = vld [vmem:[%s2 + $0x28] sm:$0xff]
  %v83 = vld [vmem:[%s2 + $0x30] sm:$0xff]
  %v84 = vld [vmem:[%s2 + $0x38] sm:$0xff]
  %v85 = vld [vmem:[%s2 + $0x40] sm:$0xff]
  %v86 = vld [vmem:[%s2 + $0x48] sm:$0xff]
  %v87 = vld [vmem:[%s2 + $0x50] sm:$0xff]
  %v88 = vld [vmem:[%s2 + $0x58] sm:$0xff]
  %v89 = vld [vmem:[%s2 + $0x60] sm:$0xff]
  %v90 = vld [vmem:[%s2 + $0x68] sm:$0xff]
  %v91 = vld [vmem:[%s2 + $0x70] sm:$0xff]
  %v92 = vld [vmem:[%s2 + $0x78] sm:$0xff]
  %v93 = vld [vmem:[%s2 + $0x80] sm:$0xff]
  %v94 = vld [vmem:[%s2 + $0x88] sm:$0xff]
  %v95 = vld [vmem:[%s2 + $0x90] sm:$0xff]
  %v96 = vld [vmem:[%s2 + $0x98] sm:$0xff]
  %v97 = vld [vmem:[%s2 + $0xa0] sm:$0xff]
  %v98 = vmul.f32 %v56, %v77
  %v99 = vmul.f32 %v57, %v78
  %v100 = vmul.f32 %v58, %v79
  %v101 = vmul.f32 %v59, %v80
  %v102 = vmul.f32 %v60, %v81
  %v103 = vmul.f32 %v61, %v82
  %v104 = vmul.f32 %v62, %v83
  %v105 = vmul.f32 %v63, %v84
  %v106 = vmul.f32 %v64, %v85
  %v107 = vmul.f32 %v65, %v86
  %v108 = vmul.f32 %v66, %v87
  %v109 = vmul.f32 %v67, %v88
  %v110 = vmul.f32 %v68, %v89
  %v111 = vmul.f32 %v69, %v90
  %v112 = vmul.f32 %v70, %v91
  %v113 = vmul.f32 %v71, %v92
  %v114 = vmul.f32 %v72, %v93
  %v115 = vmul.f32 %v73, %v94
  %v116 = vmul.f32 %v74, %v95
  %v117 = vmul.f32 %v75, %v96
  %v118 = vmul.f32 %v76, %v97
  %v119 = vadd.f32 %v98, %v101
  %v120 = vadd.f32 %v119, %v104
  %v121 = vadd.f32 %v120, %v107
  %v122 = vadd.f32 %v121, %v110
  %v123 = vadd.f32 %v122, %v113
  %v124 = vadd.f32 %v123, %v116
  %v125 = vrot.slane %v124, 4
  %v126 = vadd.f32 %v124, %v125
  %v127 = vrot.slane %v126, 2
  %v128 = vadd.f32 %v126, %v127
  %v129 = vrot.slane %v128, 1
  %v130 = vadd.f32 %v128, %v129
  %v131 = vadd.f32 %v99, %v102
  %v132 = vadd.f32 %v131, %v105
  %v133 = vadd.f32 %v132, %v108
  %v134 = vadd.f32 %v133, %v111
  %v135 = vadd.f32 %v134, %v114
  %v136 = vadd.f32 %v135, %v117
  %v137 = vrot.slane %v136, 4
  %v138 = vadd.f32 %v136, %v137
  %v139 = vrot.slane %v138, 2
  %v140 = vadd.f32 %v138, %v139
  %v141 = vrot.slane %v140, 1
  %v142 = vadd.f32 %v140, %v141
  %v143 = vadd.f32 %v100, %v103
  %v144 = vadd.f32 %v143, %v106
  %v145 = vadd.f32 %v144, %v109
  %v146 = vadd.f32 %v145, %v112
  %v147 = vadd.f32 %v146, %v115
  %v148 = vadd.f32 %v147, %v118
  %v149 = vrot.slane %v148, 4
  %v150 = vadd.f32 %v148, %v149
  %v151 = vrot.slane %v150, 2
  %v152 = vadd.f32 %v150, %v151
  %v153 = vrot.slane %v152, 1
  %v154 = vadd.f32 %v152, %v153
  %v158 = vrot.slane %v142, 7
  %v159 = vrot.slane %v154, 6
  %vm160 = vcmask 1040384
  %v161 = vsel %vm160, %v130, %v158
  %vm162 = vcmask 1041408
  %v163 = vsel %vm162, %v161, %v159
  %v165 = vlaneseq
  %vm166 = vcmp.ge.s32.totalorder %v165, 0
  %vm167 = vcmp.lt.s32.totalorder %v165, 384
  %vm168 = vmand %vm166, %vm167
  %169 = vst.msk [vmem:[%s3] sm:$0x7] %vm168, %v163
  // Predicated region
  $region14: #{forward.1} parent=0 // pred_check
    _
  $region15: #{forward.1} parent=0 // pred_check_branch
    %171 = sbr.rel (0) target = $region17
  $region16: #{forward.1} parent=0 // pred_region
    _
  $region17: #{forward.1} parent=0 // pred_fallthru
    _
  // Predicated region
  $region18: #{forward.1} parent=0 // pred_check
    _
  $region19: #{forward.1} parent=0 // pred_check_branch
    %173 = sbr.rel (0) target = $region21
  $region20: #{forward.1} parent=0 // pred_region
    _
  $region21: #{forward.1} parent=0 // pred_fallthru
    _

</llo_original>
